<compile_context>
chip_gen: v5e
topology: v5e:2x2
jax: 0.10.0
libtpu: 0.0.40
codegen_flags: <defaults>
</compile_context>

<pallas_src>
import functools
import math

import jax
import jax.numpy as jnp
import numpy as np
from jax.experimental import pallas as pl
from jax.experimental.pallas import tpu as pltpu


# ----------------------------- kernel --------------------------------------


def wa_kernel(x_ref, wA_ref, wB_ref, b_ref, o_ref, psum_ref, *, h_total, w_size):
    """grid = (batch tiles, lane tiles over the flattened H*W axis).

    x_ref    : (Bt, C, Lb)   lane-dense input block (flattened H*W axis)
    wA_ref   : (7, C, 3C)    fused 1x3 weights for the seven C->C convs
    wB_ref   : (C, 9C)       fused 1x3 weights for the 3C->C conv (fc_V4[0])
    b_ref    : (8, C, 1)     conv biases
    o_ref    : (1, C, Bt*W)  output slab (batch packed along lanes)
    psum_ref : (Bt, C, Lp)   f32 scratch; lane q holds sum over l == q (mod Lp)
    """
    bt, c, lb = x_ref.shape
    lp = psum_ref.shape[2]
    w = w_size
    n = bt * w
    li = pl.program_id(1)

    @pl.when(li == 0)
    def _():
        psum_ref[...] = jnp.zeros_like(psum_ref)

    # Fold this lane-dense block into the Lp-lane accumulator.  Chunk offsets
    # are multiples of Lp (itself a multiple of 128): whole lane-chunk slices,
    # no relayout, no cross-sublane reduce -- just VALU adds at HBM rate.
    blk = x_ref[...].astype(jnp.float32)                  # (Bt, C, Lb)
    acc = psum_ref[...]
    for j in range(lb // lp):
        acc = acc + blk[:, :, j * lp:(j + 1) * lp]
    psum_ref[...] = acc

    @pl.when(li == pl.num_programs(1) - 1)
    def _():
        ps = psum_ref[...] * (1.0 / float(h_total))       # (Bt, C, Lp)

        # Collapse the P = Lp/W interleaved H-phases down to W lanes.
        p_phases = lp // w
        if p_phases == 1:
            pcols = ps[:, :, 0:w]
        elif lp == 128:
            # P is a power of two here; the cyclic roll(+add) tree over the
            # full 128-lane axis gives the per-column sum regardless of the
            # roll direction, and runs on the XLU slot.
            s = lp // 2
            while s >= w:
                ps = ps + pltpu.roll(ps, shift=s, axis=2)
                s //= 2
            pcols = ps[:, :, 0:w]
        else:
            # Generic (rare) fallback: finalize-only slice+add over phases.
            acc_w = ps[:, :, 0:w]
            for ph in range(1, p_phases):
                acc_w = acc_w + ps[:, :, ph * w:(ph + 1) * w]
            pcols = acc_w                                 # (Bt, C, W)

        # Pack the batch tile along lanes -> (C, N), N = Bt*W.
        if bt == 1:
            p0 = pcols[0]
        else:
            p0 = jnp.concatenate([pcols[j] for j in range(bt)], axis=1)

        # Per-image seam masks: the +/-1 width shifts of the 1x3 conv must not
        # leak across images packed along the lane axis.
        lane = jax.lax.broadcasted_iota(jnp.int32, (1, n), 1) % w
        first_col = lane == 0
        last_col = lane == (w - 1)

        def taps(p):
            # Stack the 3 width-shifted copies along K so the whole 1x3 conv
            # becomes one MXU matmul with K = 3*C_in.
            c_in = p.shape[0]
            zcol = jnp.zeros((c_in, 1), jnp.float32)
            pp = jnp.concatenate([zcol, p, zcol], axis=1)      # (c_in, N+2)
            right = jnp.where(first_col, 0.0, pp[:, 0:n])      # tap0: p[., l-1]
            left = jnp.where(last_col, 0.0, pp[:, 2:n + 2])    # tap2: p[., l+1]
            return jnp.concatenate([right, p, left], axis=0)   # (3*c_in, N)

        def conv_relu(p, wmat, bvec):
            y = jnp.dot(wmat, taps(p), preferred_element_type=jnp.float32)
            return jnp.maximum(y + bvec, 0.0)

        def block2(p, wa, ba, wb, bb):   # Conv1x3 -> ReLU -> Conv1x3 -> ReLU
            return conv_relu(conv_relu(p, wa, ba), wb, bb)

        vy1 = block2(p0, wA_ref[0], b_ref[0], wA_ref[1], b_ref[1])   # fc_V_1
        p1 = vy1 * p0                                                # mean_H(x_1)
        vy2 = block2(p1, wA_ref[2], b_ref[2], wA_ref[3], b_ref[3])   # fc_V_2
        p2 = vy2 * p1                                                # mean_H(x_2)
        vy3 = block2(p2, wA_ref[4], b_ref[4], wA_ref[5], b_ref[5])   # fc_V_3
        p3 = vy3 * p2                                                # mean_H(x_3)
        p4 = jnp.concatenate([p1, p2, p3], axis=0)                   # (3C, N)
        vy4 = conv_relu(conv_relu(p4, wB_ref[...], b_ref[6]),        # fc_V_4
                        wA_ref[6], b_ref[7])
        o_ref[0] = vy4.astype(o_ref.dtype)


# ----------------------------- tiling helpers -------------------------------


@functools.lru_cache(maxsize=1)
def _vmem_capacity_bytes():
    try:
        return int(pltpu.get_tpu_info().vmem_capacity_bytes)
    except Exception:
        return 64 * 1024 * 1024          # conservative default (v7x per-core)


def _pick_bt(b, w):
    """Images per batch tile (matmul N = bt*w, target ~256), but keep >= 2
    batch blocks when possible so v7x's two TensorCores both get work."""
    target_n = 256
    cap = b if b < 2 else max(1, b // 2)
    want = max(1, target_n // w) if w < target_n else 1
    bt = max(1, min(cap, want))
    while b % bt != 0:
        bt -= 1
    return bt


def _pick_lb(hw, lp, bt, c, itemsize):
    """Lane-block size: a multiple of lp dividing hw, sized for a multi-MiB
    double-buffered x block within the device's VMEM budget."""
    n_chunks = hw // lp
    per_chunk = max(1, bt * c * lp * itemsize)
    budget = min(8 << 20, _vmem_capacity_bytes() // 8)   # per x buffer
    k = max(1, min(64, n_chunks, budget // per_chunk))
    while n_chunks % k != 0:
        k -= 1
    return k * lp


# ----------------------------- wrapper --------------------------------------


@functools.partial(jax.jit, static_argnames=("bt", "lb"))
def wa_forward(x, wA, wB, b_slab, *, bt=None, lb=None):
    b, c, h, w = x.shape
    hw = h * w
    if bt is None:
        bt = _pick_bt(b, w)
    assert b % bt == 0, (b, bt)
    nb = b // bt

    # Lane-dense accumulator width: smallest multiple of both 128 and W; fall
    # back to the whole flattened image if it doesn't divide H*W.
    lp = (128 * w) // math.gcd(128, w)
    if hw % lp != 0:
        lp = hw
    if lb is None:
        lb = _pick_lb(hw, lp, bt, c, x.dtype.itemsize)
    assert hw % lb == 0 and lb % lp == 0, (hw, lb, lp)
    nl = hw // lb

    xf = x.reshape(b, c, hw)             # free: H, W are already contiguous

    # VMEM limit from actual block sizes (double-buffered x/out + weight/bias
    # slabs + f32 accumulator + compiler slack), capped per generation.
    isz = x.dtype.itemsize
    need = (2 * bt * c * lb * isz + 2 * c * bt * w * isz
            + 2 * 4 * (wA.size + wB.size + b_slab.size)
            + 4 * bt * c * lp + (4 << 20))
    vmem_limit = int(min(_vmem_capacity_bytes() * 3 // 4, max(need, 32 << 20)))

    out = pl.pallas_call(
        functools.partial(wa_kernel, h_total=h, w_size=w),
        out_shape=jax.ShapeDtypeStruct((nb, c, bt * w), x.dtype),
        grid_spec=pltpu.PrefetchScalarGridSpec(
            num_scalar_prefetch=0,
            grid=(nb, nl),
            in_specs=[
                pl.BlockSpec((bt, c, lb), lambda bi, li: (bi, 0, li)),
                # Constant block index -> weights/biases are DMA'd once and
                # stay resident across the whole grid.
                pl.BlockSpec(wA.shape, lambda bi, li: (0, 0, 0)),
                pl.BlockSpec(wB.shape, lambda bi, li: (0, 0)),
                pl.BlockSpec(b_slab.shape, lambda bi, li: (0, 0, 0)),
            ],
            out_specs=pl.BlockSpec((1, c, bt * w), lambda bi, li: (bi, 0, 0)),
            scratch_shapes=[pltpu.VMEM((bt, c, lp), jnp.float32)],
        ),
        compiler_params=pltpu.CompilerParams(
            dimension_semantics=("parallel", "arbitrary"),
            vmem_limit_bytes=vmem_limit,
        ),
    )(xf, wA, wB, b_slab)

    # Un-pack the lane-dense (nb, C, Bt*W) slab back to PyTorch's (B, C, 1, W).
    return out.reshape(nb, c, bt, w).transpose(0, 2, 1, 3).reshape(b, c, 1, w)


# ----------------------------- parameters -----------------------------------


def init_params(key, channel):
    """Deterministic Conv2d-style init (uniform +/- 1/sqrt(fan_in)).

    Returns 8 (weight, bias) pairs; weight stored as (3, C_out, C_in)
    (kernel-tap major), bias as (C_out,)."""
    io = [(channel, channel)] * 6 + [(channel, 3 * channel), (channel, channel)]
    params = []
    for out_c, in_c in io:
        key, kw, kb = jax.random.split(key, 3)
        fan_in = in_c * 1 * 3
        bound = 1.0 / np.sqrt(fan_in)
        wgt = jax.random.uniform(kw, (3, out_c, in_c), jnp.float32, -bound, bound)
        bias = jax.random.uniform(kb, (out_c,), jnp.float32, -bound, bound)
        params.append((wgt, bias))
    return params


def pack_params(params, channel):
    """Pack the 8 convs into: wA (7, C, 3C) for the seven C->C convs, wB
    (C, 9C) for the 3C->C conv (first conv of fc_Vertical_4), biases (8, C, 1).
    Taps are fused along K as [tap0 | tap1 | tap2] to match the in-kernel
    activation stacking.  No zero-padded columns."""
    c = channel
    wA = np.zeros((7, c, 3 * c), np.float32)
    wB = np.zeros((c, 9 * c), np.float32)
    b_slab = np.zeros((8, c, 1), np.float32)
    a_i = 0
    for idx, (wgt, bias) in enumerate(params):
        fused = np.concatenate([np.asarray(wgt[k]) for k in range(3)], axis=1)
        if idx == 6:          # the 3C -> C conv
            wB[...] = fused
        else:
            wA[a_i] = fused
            a_i += 1
        b_slab[idx, :, 0] = np.asarray(bias)
    return jnp.asarray(wA), jnp.asarray(wB), jnp.asarray(b_slab)


# ----------------------------- reference (plain JAX) ------------------------


def ref_forward(x, params):
    """Literal translation of the PyTorch module (materializes x_1/x_2/x_3),
    independently validating the pooling-identity rewrite in the kernel."""

    def conv_relu(p, w3, bias):  # p: (B, C_in, W)
        _, _, width = p.shape
        pp = jnp.pad(p, ((0, 0), (0, 0), (1, 1)))
        acc = bias[None, :, None]
        for k in range(3):
            acc = acc + jnp.einsum("oi,biw->bow", w3[k], pp[:, :, k:k + width])
        return jax.nn.relu(acc)

    def block(p, idx):
        wa, ba = params[2 * idx]
        wb, bb = params[2 * idx + 1]
        return conv_relu(conv_relu(p, wa, ba), wb, bb)

    p0 = jnp.mean(x, axis=2)
    vy1 = block(p0, 0)
    x1 = vy1[:, :, None, :] * x
    p1 = jnp.mean(x1, axis=2)
    vy2 = block(p1, 1)
    x2 = vy2[:, :, None, :] * x1
    p2 = jnp.mean(x2, axis=2)
    vy3 = block(p2, 2)
    x3 = vy3[:, :, None, :] * x2
    p3 = jnp.mean(x3, axis=2)
    p4 = jnp.concatenate([p1, p2, p3], axis=1)
    vy4 = block(p4, 3)
    return vy4[:, :, None, :]


# ----------------------------- main -----------------------------------------

if __name__ == "__main__":
    key = jax.random.PRNGKey(0)
    kx, kp = jax.random.split(key)

    B, C, H, W = 2, 4, 16, 16
    x = jax.random.normal(kx, (B, C, H, W), dtype=jnp.float32)
    params = init_params(kp, C)
    wA, wB, b_slab = pack_params(params, C)

    expected = jax.block_until_ready(ref_forward(x, params))

    # Default tiling (auto block sizes).
    out = jax.block_until_ready(wa_forward(x, wA, wB, b_slab))
    assert out.shape == (B, C, 1, W), out.shape
    np.testing.assert_allclose(np.asarray(out), np.asarray(expected),
                               rtol=1e-4, atol=1e-5)

    # Force two lane-blocks (lb=128) to exercise the accumulating-grid path
    # and the XLU roll-tree phase collapse across multiple grid steps.
    out2 = jax.block_until_ready(wa_forward(x, wA, wB, b_slab, lb=128))
    np.testing.assert_allclose(np.asarray(out2), np.asarray(expected),
                               rtol=1e-4, atol=1e-5)

    print("KERNEL_OK")
</pallas_src>

<mosaic_0001>
module attributes {stable_mosaic.version = 11 : i64} {
  func.func @wa_kernel(%arg0: i32, %arg1: i32, %arg2: memref<1x4x256xf32, #tpu.memory_space<vmem>>, %arg3: memref<7x4x12xf32, #tpu.memory_space<vmem>>, %arg4: memref<4x36xf32, #tpu.memory_space<vmem>>, %arg5: memref<8x4x1xf32, #tpu.memory_space<vmem>>, %arg6: memref<1x4x16xf32, #tpu.memory_space<vmem>>, %arg7: memref<1x4x128xf32, #tpu.memory_space<vmem>>) attributes {dimension_semantics = [#tpu.dimension_semantics<parallel>, #tpu.dimension_semantics<arbitrary>], iteration_bounds = array<i64: 2, 1>, scalar_prefetch = 0 : i64, scratch_operands = 1 : i64, tpu.core_type = #tpu.core_type<tc>, window_params = [{transform_indices = @transform_0, window_bounds = array<i64: 1, 4, 256>}, {pipeline_mode = #tpu.pipeline_mode<synchronous>, transform_indices = @transform_1, window_bounds = array<i64: 7, 4, 12>}, {pipeline_mode = #tpu.pipeline_mode<synchronous>, transform_indices = @transform_2, window_bounds = array<i64: 4, 36>}, {pipeline_mode = #tpu.pipeline_mode<synchronous>, transform_indices = @transform_3, window_bounds = array<i64: 8, 4, 1>}, {transform_indices = @transform_4, window_bounds = array<i64: 1, 4, 16>}]} {
    %c0_i32 = arith.constant 0 : i32
    %0 = arith.cmpi eq, %arg1, %c0_i32 : i32
    %1 = arith.extui %0 : i1 to i32
    %c0_i32_0 = arith.constant 0 : i32
    %2 = arith.cmpi ne, %1, %c0_i32_0 : i32
    scf.if %2 {
      %cst = arith.constant 0.000000e+00 : f32
      %13 = vector.broadcast %cst : f32 to vector<1x4x128xf32>
      %c0_11 = arith.constant 0 : index
      %c0_12 = arith.constant 0 : index
      %c0_13 = arith.constant 0 : index
      %14 = vector.load %arg7[%c0_11, %c0_12, %c0_13] : memref<1x4x128xf32, #tpu.memory_space<vmem>>, vector<1x4x128xf32>
      tpu.vector_store %arg7[%c0_11, %c0_12, %c0_13], %13 {strides = array<i32>} : memref<1x4x128xf32, #tpu.memory_space<vmem>>, vector<1x4x128xf32>,
    } else {
    }
    %c0 = arith.constant 0 : index
    %c0_1 = arith.constant 0 : index
    %c0_2 = arith.constant 0 : index
    %3 = vector.load %arg2[%c0, %c0_1, %c0_2] : memref<1x4x256xf32, #tpu.memory_space<vmem>>, vector<1x4x256xf32>
    %c0_3 = arith.constant 0 : index
    %c0_4 = arith.constant 0 : index
    %c0_5 = arith.constant 0 : index
    %4 = vector.load %arg7[%c0_3, %c0_4, %c0_5] : memref<1x4x128xf32, #tpu.memory_space<vmem>>, vector<1x4x128xf32>
    %5 = vector.extract_strided_slice %3 {offsets = [0, 0, 0], sizes = [1, 4, 128], strides = [1, 1, 1]} : vector<1x4x256xf32> to vector<1x4x128xf32>
    %6 = arith.addf %4, %5 : vector<1x4x128xf32>
    %7 = vector.extract_strided_slice %3 {offsets = [0, 0, 128], sizes = [1, 4, 128], strides = [1, 1, 1]} : vector<1x4x256xf32> to vector<1x4x128xf32>
    %8 = arith.addf %6, %7 : vector<1x4x128xf32>
    %c0_6 = arith.constant 0 : index
    %c0_7 = arith.constant 0 : index
    %c0_8 = arith.constant 0 : index
    %9 = vector.load %arg7[%c0_6, %c0_7, %c0_8] : memref<1x4x128xf32, #tpu.memory_space<vmem>>, vector<1x4x128xf32>
    tpu.vector_store %arg7[%c0_6, %c0_7, %c0_8], %8 {strides = array<i32>} : memref<1x4x128xf32, #tpu.memory_space<vmem>>, vector<1x4x128xf32>,
    %c0_i32_9 = arith.constant 0 : i32
    %10 = arith.cmpi eq, %arg1, %c0_i32_9 : i32
    %11 = arith.extui %10 : i1 to i32
    %c0_i32_10 = arith.constant 0 : i32
    %12 = arith.cmpi ne, %11, %c0_i32_10 : i32
    scf.if %12 {
      %c0_11 = arith.constant 0 : index
      %c0_12 = arith.constant 0 : index
      %c0_13 = arith.constant 0 : index
      %13 = vector.load %arg7[%c0_11, %c0_12, %c0_13] : memref<1x4x128xf32, #tpu.memory_space<vmem>>, vector<1x4x128xf32>
      %cst = arith.constant 6.250000e-02 : f32
      %14 = vector.broadcast %cst : f32 to vector<1x4x128xf32>
      %15 = arith.mulf %13, %14 : vector<1x4x128xf32>
      %c64_i32 = arith.constant 64 : i32
      %16 = tpu.dynamic_rotate %15 by %c64_i32 dim 2 : vector<1x4x128xf32>, i32 -> vector<1x4x128xf32>
      %17 = arith.addf %15, %16 : vector<1x4x128xf32>
      %c32_i32 = arith.constant 32 : i32
      %18 = tpu.dynamic_rotate %17 by %c32_i32 dim 2 : vector<1x4x128xf32>, i32 -> vector<1x4x128xf32>
      %19 = arith.addf %17, %18 : vector<1x4x128xf32>
      %c16_i32 = arith.constant 16 : i32
      %20 = tpu.dynamic_rotate %19 by %c16_i32 dim 2 : vector<1x4x128xf32>, i32 -> vector<1x4x128xf32>
      %21 = arith.addf %19, %20 : vector<1x4x128xf32>
      %22 = vector.extract_strided_slice %21 {offsets = [0, 0, 0], sizes = [1, 4, 16], strides = [1, 1, 1]} : vector<1x4x128xf32> to vector<1x4x16xf32>
      %23 = vector.shape_cast %22 : vector<1x4x16xf32> to vector<4x16xf32>
      %24 = tpu.iota {dimensions = array<i32: 1>} : vector<1x16xi32>
      %c16_i32_14 = arith.constant 16 : i32
      %c0_i32_15 = arith.constant 0 : i32
      %25 = arith.cmpi eq, %c16_i32_14, %c0_i32_15 : i32
      %c1_i32 = arith.constant 1 : i32
      %26 = arith.select %25, %c1_i32, %c16_i32_14 : i32
      %27 = vector.broadcast %26 : i32 to vector<1x16xi32>
      %28 = arith.remsi %24, %27 : vector<1x16xi32>
      %c0_i32_16 = arith.constant 0 : i32
      %29 = vector.broadcast %c0_i32_16 : i32 to vector<1x16xi32>
      %30 = arith.cmpi ne, %28, %29 : vector<1x16xi32>
      %c0_i32_17 = arith.constant 0 : i32
      %31 = vector.broadcast %c0_i32_17 : i32 to vector<1x16xi32>
      %32 = arith.cmpi slt, %28, %31 : vector<1x16xi32>
      %c0_i32_18 = arith.constant 0 : i32
      %33 = arith.cmpi slt, %26, %c0_i32_18 : i32
      %34 = vector.broadcast %33 : i1 to vector<1x16xi1>
      %35 = vector.broadcast %34 : vector<1x16xi1> to vector<1x16xi1>
      %36 = arith.xori %32, %35 : vector<1x16xi1>
      %37 = arith.andi %36, %30 : vector<1x16xi1>
      %38 = vector.broadcast %26 : i32 to vector<1x16xi32>
      %39 = arith.addi %28, %38 : vector<1x16xi32>
      %40 = arith.select %37, %39, %28 : vector<1x16xi1>, vector<1x16xi32>
      %c0_i32_19 = arith.constant 0 : i32
      %41 = vector.broadcast %c0_i32_19 : i32 to vector<1x16xi32>
      %42 = arith.cmpi eq, %40, %41 : vector<1x16xi32>
      %c15_i32 = arith.constant 15 : i32
      %43 = vector.broadcast %c15_i32 : i32 to vector<1x16xi32>
      %44 = arith.cmpi eq, %40, %43 : vector<1x16xi32>
      %c0_20 = arith.constant 0 : index
      %c0_21 = arith.constant 0 : index
      %c0_22 = arith.constant 0 : index
      %45 = vector.load %arg3[%c0_20, %c0_21, %c0_22] : memref<7x4x12xf32, #tpu.memory_space<vmem>>, vector<1x4x12xf32>
      %46 = vector.shape_cast %45 : vector<1x4x12xf32> to vector<4x12xf32>
      %c0_23 = arith.constant 0 : index
      %c0_24 = arith.constant 0 : index
      %c0_25 = arith.constant 0 : index
      %47 = vector.load %arg5[%c0_23, %c0_24, %c0_25] : memref<8x4x1xf32, #tpu.memory_space<vmem>>, vector<1x4x1xf32>
      %48 = vector.shape_cast %47 : vector<1x4x1xf32> to vector<4x1xf32>
      %c1 = arith.constant 1 : index
      %c0_26 = arith.constant 0 : index
      %c0_27 = arith.constant 0 : index
      %49 = vector.load %arg3[%c1, %c0_26, %c0_27] : memref<7x4x12xf32, #tpu.memory_space<vmem>>, vector<1x4x12xf32>
      %50 = vector.shape_cast %49 : vector<1x4x12xf32> to vector<4x12xf32>
      %c1_28 = arith.constant 1 : index
      %c0_29 = arith.constant 0 : index
      %c0_30 = arith.constant 0 : index
      %51 = vector.load %arg5[%c1_28, %c0_29, %c0_30] : memref<8x4x1xf32, #tpu.memory_space<vmem>>, vector<1x4x1xf32>
      %52 = vector.shape_cast %51 : vector<1x4x1xf32> to vector<4x1xf32>
      %cst_31 = arith.constant 0.000000e+00 : f32
      %53 = vector.broadcast %cst_31 : f32 to vector<4x1xf32>
      %54 = tpu.concatenate %53, %23, %53 in 1 : vector<4x1xf32>, vector<4x16xf32>, vector<4x1xf32> -> vector<4x18xf32>
      %55 = vector.extract_strided_slice %54 {offsets = [0, 0], sizes = [4, 16], strides = [1, 1]} : vector<4x18xf32> to vector<4x16xf32>
      %cst_32 = arith.constant 0.000000e+00 : f32
      %56 = vector.shape_cast %42 : vector<1x16xi1> to vector<1x16xi1>
      %57 = vector.broadcast %56 : vector<1x16xi1> to vector<4x16xi1>
      %58 = vector.broadcast %cst_32 : f32 to vector<4x16xf32>
      %59 = arith.select %57, %58, %55 : vector<4x16xi1>, vector<4x16xf32>
      %60 = vector.extract_strided_slice %54 {offsets = [0, 2], sizes = [4, 16], strides = [1, 1]} : vector<4x18xf32> to vector<4x16xf32>
      %cst_33 = arith.constant 0.000000e+00 : f32
      %61 = vector.shape_cast %44 : vector<1x16xi1> to vector<1x16xi1>
      %62 = vector.broadcast %61 : vector<1x16xi1> to vector<4x16xi1>
      %63 = vector.broadcast %cst_33 : f32 to vector<4x16xf32>
      %64 = arith.select %62, %63, %60 : vector<4x16xi1>, vector<4x16xf32>
      %65 = tpu.concatenate %59, %23, %64 in 0 : vector<4x16xf32>, vector<4x16xf32>, vector<4x16xf32> -> vector<12x16xf32>
      %cst_34 = arith.constant dense<0.000000e+00> : vector<4x16xf32>
      %66 = tpu.matmul %46, %65, %cst_34 {dimension_numbers = #tpu.dot_dimension_numbers<[1], [0], [0], [1], [0, 0, 1, 1], [], []>} : vector<4x12xf32>, vector<12x16xf32>, vector<4x16xf32> -> vector<4x16xf32>
      %67 = vector.broadcast %48 : vector<4x1xf32> to vector<4x16xf32>
      %68 = arith.addf %66, %67 : vector<4x16xf32>
      %cst_35 = arith.constant 0.000000e+00 : f32
      %69 = vector.broadcast %cst_35 : f32 to vector<4x16xf32>
      %70 = arith.maximumf %68, %69 : vector<4x16xf32>
      %cst_36 = arith.constant 0.000000e+00 : f32
      %71 = vector.broadcast %cst_36 : f32 to vector<4x1xf32>
      %72 = tpu.concatenate %71, %70, %71 in 1 : vector<4x1xf32>, vector<4x16xf32>, vector<4x1xf32> -> vector<4x18xf32>
      %73 = vector.extract_strided_slice %72 {offsets = [0, 0], sizes = [4, 16], strides = [1, 1]} : vector<4x18xf32> to vector<4x16xf32>
      %cst_37 = arith.constant 0.000000e+00 : f32
      %74 = vector.shape_cast %42 : vector<1x16xi1> to vector<1x16xi1>
      %75 = vector.broadcast %74 : vector<1x16xi1> to vector<4x16xi1>
      %76 = vector.broadcast %cst_37 : f32 to vector<4x16xf32>
      %77 = arith.select %75, %76, %73 : vector<4x16xi1>, vector<4x16xf32>
      %78 = vector.extract_strided_slice %72 {offsets = [0, 2], sizes = [4, 16], strides = [1, 1]} : vector<4x18xf32> to vector<4x16xf32>
      %cst_38 = arith.constant 0.000000e+00 : f32
      %79 = vector.shape_cast %44 : vector<1x16xi1> to vector<1x16xi1>
      %80 = vector.broadcast %79 : vector<1x16xi1> to vector<4x16xi1>
      %81 = vector.broadcast %cst_38 : f32 to vector<4x16xf32>
      %82 = arith.select %80, %81, %78 : vector<4x16xi1>, vector<4x16xf32>
      %83 = tpu.concatenate %77, %70, %82 in 0 : vector<4x16xf32>, vector<4x16xf32>, vector<4x16xf32> -> vector<12x16xf32>
      %cst_39 = arith.constant dense<0.000000e+00> : vector<4x16xf32>
      %84 = tpu.matmul %50, %83, %cst_39 {dimension_numbers = #tpu.dot_dimension_numbers<[1], [0], [0], [1], [0, 0, 1, 1], [], []>} : vector<4x12xf32>, vector<12x16xf32>, vector<4x16xf32> -> vector<4x16xf32>
      %85 = vector.broadcast %52 : vector<4x1xf32> to vector<4x16xf32>
      %86 = arith.addf %84, %85 : vector<4x16xf32>
      %cst_40 = arith.constant 0.000000e+00 : f32
      %87 = vector.broadcast %cst_40 : f32 to vector<4x16xf32>
      %88 = arith.maximumf %86, %87 : vector<4x16xf32>
      %89 = arith.mulf %88, %23 : vector<4x16xf32>
      %c2 = arith.constant 2 : index
      %c0_41 = arith.constant 0 : index
      %c0_42 = arith.constant 0 : index
      %90 = vector.load %arg3[%c2, %c0_41, %c0_42] : memref<7x4x12xf32, #tpu.memory_space<vmem>>, vector<1x4x12xf32>
      %91 = vector.shape_cast %90 : vector<1x4x12xf32> to vector<4x12xf32>
      %c2_43 = arith.constant 2 : index
      %c0_44 = arith.constant 0 : index
      %c0_45 = arith.constant 0 : index
      %92 = vector.load %arg5[%c2_43, %c0_44, %c0_45] : memref<8x4x1xf32, #tpu.memory_space<vmem>>, vector<1x4x1xf32>
      %93 = vector.shape_cast %92 : vector<1x4x1xf32> to vector<4x1xf32>
      %c3 = arith.constant 3 : index
      %c0_46 = arith.constant 0 : index
      %c0_47 = arith.constant 0 : index
      %94 = vector.load %arg3[%c3, %c0_46, %c0_47] : memref<7x4x12xf32, #tpu.memory_space<vmem>>, vector<1x4x12xf32>
      %95 = vector.shape_cast %94 : vector<1x4x12xf32> to vector<4x12xf32>
      %c3_48 = arith.constant 3 : index
      %c0_49 = arith.constant 0 : index
      %c0_50 = arith.constant 0 : index
      %96 = vector.load %arg5[%c3_48, %c0_49, %c0_50] : memref<8x4x1xf32, #tpu.memory_space<vmem>>, vector<1x4x1xf32>
      %97 = vector.shape_cast %96 : vector<1x4x1xf32> to vector<4x1xf32>
      %cst_51 = arith.constant 0.000000e+00 : f32
      %98 = vector.broadcast %cst_51 : f32 to vector<4x1xf32>
      %99 = tpu.concatenate %98, %89, %98 in 1 : vector<4x1xf32>, vector<4x16xf32>, vector<4x1xf32> -> vector<4x18xf32>
      %100 = vector.extract_strided_slice %99 {offsets = [0, 0], sizes = [4, 16], strides = [1, 1]} : vector<4x18xf32> to vector<4x16xf32>
      %cst_52 = arith.constant 0.000000e+00 : f32
      %101 = vector.shape_cast %42 : vector<1x16xi1> to vector<1x16xi1>
      %102 = vector.broadcast %101 : vector<1x16xi1> to vector<4x16xi1>
      %103 = vector.broadcast %cst_52 : f32 to vector<4x16xf32>
      %104 = arith.select %102, %103, %100 : vector<4x16xi1>, vector<4x16xf32>
      %105 = vector.extract_strided_slice %99 {offsets = [0, 2], sizes = [4, 16], strides = [1, 1]} : vector<4x18xf32> to vector<4x16xf32>
      %cst_53 = arith.constant 0.000000e+00 : f32
      %106 = vector.shape_cast %44 : vector<1x16xi1> to vector<1x16xi1>
      %107 = vector.broadcast %106 : vector<1x16xi1> to vector<4x16xi1>
      %108 = vector.broadcast %cst_53 : f32 to vector<4x16xf32>
      %109 = arith.select %107, %108, %105 : vector<4x16xi1>, vector<4x16xf32>
      %110 = tpu.concatenate %104, %89, %109 in 0 : vector<4x16xf32>, vector<4x16xf32>, vector<4x16xf32> -> vector<12x16xf32>
      %cst_54 = arith.constant dense<0.000000e+00> : vector<4x16xf32>
      %111 = tpu.matmul %91, %110, %cst_54 {dimension_numbers = #tpu.dot_dimension_numbers<[1], [0], [0], [1], [0, 0, 1, 1], [], []>} : vector<4x12xf32>, vector<12x16xf32>, vector<4x16xf32> -> vector<4x16xf32>
      %112 = vector.broadcast %93 : vector<4x1xf32> to vector<4x16xf32>
      %113 = arith.addf %111, %112 : vector<4x16xf32>
      %cst_55 = arith.constant 0.000000e+00 : f32
      %114 = vector.broadcast %cst_55 : f32 to vector<4x16xf32>
      %115 = arith.maximumf %113, %114 : vector<4x16xf32>
      %cst_56 = arith.constant 0.000000e+00 : f32
      %116 = vector.broadcast %cst_56 : f32 to vector<4x1xf32>
      %117 = tpu.concatenate %116, %115, %116 in 1 : vector<4x1xf32>, vector<4x16xf32>, vector<4x1xf32> -> vector<4x18xf32>
      %118 = vector.extract_strided_slice %117 {offsets = [0, 0], sizes = [4, 16], strides = [1, 1]} : vector<4x18xf32> to vector<4x16xf32>
      %cst_57 = arith.constant 0.000000e+00 : f32
      %119 = vector.shape_cast %42 : vector<1x16xi1> to vector<1x16xi1>
      %120 = vector.broadcast %119 : vector<1x16xi1> to vector<4x16xi1>
      %121 = vector.broadcast %cst_57 : f32 to vector<4x16xf32>
      %122 = arith.select %120, %121, %118 : vector<4x16xi1>, vector<4x16xf32>
      %123 = vector.extract_strided_slice %117 {offsets = [0, 2], sizes = [4, 16], strides = [1, 1]} : vector<4x18xf32> to vector<4x16xf32>
      %cst_58 = arith.constant 0.000000e+00 : f32
      %124 = vector.shape_cast %44 : vector<1x16xi1> to vector<1x16xi1>
      %125 = vector.broadcast %124 : vector<1x16xi1> to vector<4x16xi1>
      %126 = vector.broadcast %cst_58 : f32 to vector<4x16xf32>
      %127 = arith.select %125, %126, %123 : vector<4x16xi1>, vector<4x16xf32>
      %128 = tpu.concatenate %122, %115, %127 in 0 : vector<4x16xf32>, vector<4x16xf32>, vector<4x16xf32> -> vector<12x16xf32>
      %cst_59 = arith.constant dense<0.000000e+00> : vector<4x16xf32>
      %129 = tpu.matmul %95, %128, %cst_59 {dimension_numbers = #tpu.dot_dimension_numbers<[1], [0], [0], [1], [0, 0, 1, 1], [], []>} : vector<4x12xf32>, vector<12x16xf32>, vector<4x16xf32> -> vector<4x16xf32>
      %130 = vector.broadcast %97 : vector<4x1xf32> to vector<4x16xf32>
      %131 = arith.addf %129, %130 : vector<4x16xf32>
      %cst_60 = arith.constant 0.000000e+00 : f32
      %132 = vector.broadcast %cst_60 : f32 to vector<4x16xf32>
      %133 = arith.maximumf %131, %132 : vector<4x16xf32>
      %134 = arith.mulf %133, %89 : vector<4x16xf32>
      %c4 = arith.constant 4 : index
      %c0_61 = arith.constant 0 : index
      %c0_62 = arith.constant 0 : index
      %135 = vector.load %arg3[%c4, %c0_61, %c0_62] : memref<7x4x12xf32, #tpu.memory_space<vmem>>, vector<1x4x12xf32>
      %136 = vector.shape_cast %135 : vector<1x4x12xf32> to vector<4x12xf32>
      %c4_63 = arith.constant 4 : index
      %c0_64 = arith.constant 0 : index
      %c0_65 = arith.constant 0 : index
      %137 = vector.load %arg5[%c4_63, %c0_64, %c0_65] : memref<8x4x1xf32, #tpu.memory_space<vmem>>, vector<1x4x1xf32>
      %138 = vector.shape_cast %137 : vector<1x4x1xf32> to vector<4x1xf32>
      %c5 = arith.constant 5 : index
      %c0_66 = arith.constant 0 : index
      %c0_67 = arith.constant 0 : index
      %139 = vector.load %arg3[%c5, %c0_66, %c0_67] : memref<7x4x12xf32, #tpu.memory_space<vmem>>, vector<1x4x12xf32>
      %140 = vector.shape_cast %139 : vector<1x4x12xf32> to vector<4x12xf32>
      %c5_68 = arith.constant 5 : index
      %c0_69 = arith.constant 0 : index
      %c0_70 = arith.constant 0 : index
      %141 = vector.load %arg5[%c5_68, %c0_69, %c0_70] : memref<8x4x1xf32, #tpu.memory_space<vmem>>, vector<1x4x1xf32>
      %142 = vector.shape_cast %141 : vector<1x4x1xf32> to vector<4x1xf32>
      %cst_71 = arith.constant 0.000000e+00 : f32
      %143 = vector.broadcast %cst_71 : f32 to vector<4x1xf32>
      %144 = tpu.concatenate %143, %134, %143 in 1 : vector<4x1xf32>, vector<4x16xf32>, vector<4x1xf32> -> vector<4x18xf32>
      %145 = vector.extract_strided_slice %144 {offsets = [0, 0], sizes = [4, 16], strides = [1, 1]} : vector<4x18xf32> to vector<4x16xf32>
      %cst_72 = arith.constant 0.000000e+00 : f32
      %146 = vector.shape_cast %42 : vector<1x16xi1> to vector<1x16xi1>
      %147 = vector.broadcast %146 : vector<1x16xi1> to vector<4x16xi1>
      %148 = vector.broadcast %cst_72 : f32 to vector<4x16xf32>
      %149 = arith.select %147, %148, %145 : vector<4x16xi1>, vector<4x16xf32>
      %150 = vector.extract_strided_slice %144 {offsets = [0, 2], sizes = [4, 16], strides = [1, 1]} : vector<4x18xf32> to vector<4x16xf32>
      %cst_73 = arith.constant 0.000000e+00 : f32
      %151 = vector.shape_cast %44 : vector<1x16xi1> to vector<1x16xi1>
      %152 = vector.broadcast %151 : vector<1x16xi1> to vector<4x16xi1>
      %153 = vector.broadcast %cst_73 : f32 to vector<4x16xf32>
      %154 = arith.select %152, %153, %150 : vector<4x16xi1>, vector<4x16xf32>
      %155 = tpu.concatenate %149, %134, %154 in 0 : vector<4x16xf32>, vector<4x16xf32>, vector<4x16xf32> -> vector<12x16xf32>
      %cst_74 = arith.constant dense<0.000000e+00> : vector<4x16xf32>
      %156 = tpu.matmul %136, %155, %cst_74 {dimension_numbers = #tpu.dot_dimension_numbers<[1], [0], [0], [1], [0, 0, 1, 1], [], []>} : vector<4x12xf32>, vector<12x16xf32>, vector<4x16xf32> -> vector<4x16xf32>
      %157 = vector.broadcast %138 : vector<4x1xf32> to vector<4x16xf32>
      %158 = arith.addf %156, %157 : vector<4x16xf32>
      %cst_75 = arith.constant 0.000000e+00 : f32
      %159 = vector.broadcast %cst_75 : f32 to vector<4x16xf32>
      %160 = arith.maximumf %158, %159 : vector<4x16xf32>
      %cst_76 = arith.constant 0.000000e+00 : f32
      %161 = vector.broadcast %cst_76 : f32 to vector<4x1xf32>
      %162 = tpu.concatenate %161, %160, %161 in 1 : vector<4x1xf32>, vector<4x16xf32>, vector<4x1xf32> -> vector<4x18xf32>
      %163 = vector.extract_strided_slice %162 {offsets = [0, 0], sizes = [4, 16], strides = [1, 1]} : vector<4x18xf32> to vector<4x16xf32>
      %cst_77 = arith.constant 0.000000e+00 : f32
      %164 = vector.shape_cast %42 : vector<1x16xi1> to vector<1x16xi1>
      %165 = vector.broadcast %164 : vector<1x16xi1> to vector<4x16xi1>
      %166 = vector.broadcast %cst_77 : f32 to vector<4x16xf32>
      %167 = arith.select %165, %166, %163 : vector<4x16xi1>, vector<4x16xf32>
      %168 = vector.extract_strided_slice %162 {offsets = [0, 2], sizes = [4, 16], strides = [1, 1]} : vector<4x18xf32> to vector<4x16xf32>
      %cst_78 = arith.constant 0.000000e+00 : f32
      %169 = vector.shape_cast %44 : vector<1x16xi1> to vector<1x16xi1>
      %170 = vector.broadcast %169 : vector<1x16xi1> to vector<4x16xi1>
      %171 = vector.broadcast %cst_78 : f32 to vector<4x16xf32>
      %172 = arith.select %170, %171, %168 : vector<4x16xi1>, vector<4x16xf32>
      %173 = tpu.concatenate %167, %160, %172 in 0 : vector<4x16xf32>, vector<4x16xf32>, vector<4x16xf32> -> vector<12x16xf32>
      %cst_79 = arith.constant dense<0.000000e+00> : vector<4x16xf32>
      %174 = tpu.matmul %140, %173, %cst_79 {dimension_numbers = #tpu.dot_dimension_numbers<[1], [0], [0], [1], [0, 0, 1, 1], [], []>} : vector<4x12xf32>, vector<12x16xf32>, vector<4x16xf32> -> vector<4x16xf32>
      %175 = vector.broadcast %142 : vector<4x1xf32> to vector<4x16xf32>
      %176 = arith.addf %174, %175 : vector<4x16xf32>
      %cst_80 = arith.constant 0.000000e+00 : f32
      %177 = vector.broadcast %cst_80 : f32 to vector<4x16xf32>
      %178 = arith.maximumf %176, %177 : vector<4x16xf32>
      %179 = arith.mulf %178, %134 : vector<4x16xf32>
      %180 = tpu.concatenate %89, %134, %179 in 0 : vector<4x16xf32>, vector<4x16xf32>, vector<4x16xf32> -> vector<12x16xf32>
      %c0_81 = arith.constant 0 : index
      %c0_82 = arith.constant 0 : index
      %181 = vector.load %arg4[%c0_81, %c0_82] : memref<4x36xf32, #tpu.memory_space<vmem>>, vector<4x36xf32>
      %c6 = arith.constant 6 : index
      %c0_83 = arith.constant 0 : index
      %c0_84 = arith.constant 0 : index
      %182 = vector.load %arg5[%c6, %c0_83, %c0_84] : memref<8x4x1xf32, #tpu.memory_space<vmem>>, vector<1x4x1xf32>
      %183 = vector.shape_cast %182 : vector<1x4x1xf32> to vector<4x1xf32>
      %cst_85 = arith.constant 0.000000e+00 : f32
      %184 = vector.broadcast %cst_85 : f32 to vector<12x1xf32>
      %185 = tpu.concatenate %184, %180, %184 in 1 : vector<12x1xf32>, vector<12x16xf32>, vector<12x1xf32> -> vector<12x18xf32>
      %186 = vector.extract_strided_slice %185 {offsets = [0, 0], sizes = [12, 16], strides = [1, 1]} : vector<12x18xf32> to vector<12x16xf32>
      %cst_86 = arith.constant 0.000000e+00 : f32
      %187 = vector.shape_cast %42 : vector<1x16xi1> to vector<1x16xi1>
      %188 = vector.broadcast %187 : vector<1x16xi1> to vector<12x16xi1>
      %189 = vector.broadcast %cst_86 : f32 to vector<12x16xf32>
      %190 = arith.select %188, %189, %186 : vector<12x16xi1>, vector<12x16xf32>
      %191 = vector.extract_strided_slice %185 {offsets = [0, 2], sizes = [12, 16], strides = [1, 1]} : vector<12x18xf32> to vector<12x16xf32>
      %cst_87 = arith.constant 0.000000e+00 : f32
      %192 = vector.shape_cast %44 : vector<1x16xi1> to vector<1x16xi1>
      %193 = vector.broadcast %192 : vector<1x16xi1> to vector<12x16xi1>
      %194 = vector.broadcast %cst_87 : f32 to vector<12x16xf32>
      %195 = arith.select %193, %194, %191 : vector<12x16xi1>, vector<12x16xf32>
      %196 = tpu.concatenate %190, %180, %195 in 0 : vector<12x16xf32>, vector<12x16xf32>, vector<12x16xf32> -> vector<36x16xf32>
      %cst_88 = arith.constant dense<0.000000e+00> : vector<4x16xf32>
      %197 = tpu.matmul %181, %196, %cst_88 {dimension_numbers = #tpu.dot_dimension_numbers<[1], [0], [0], [1], [0, 0, 1, 1], [], []>} : vector<4x36xf32>, vector<36x16xf32>, vector<4x16xf32> -> vector<4x16xf32>
      %198 = vector.broadcast %183 : vector<4x1xf32> to vector<4x16xf32>
      %199 = arith.addf %197, %198 : vector<4x16xf32>
      %cst_89 = arith.constant 0.000000e+00 : f32
      %200 = vector.broadcast %cst_89 : f32 to vector<4x16xf32>
      %201 = arith.maximumf %199, %200 : vector<4x16xf32>
      %c6_90 = arith.constant 6 : index
      %c0_91 = arith.constant 0 : index
      %c0_92 = arith.constant 0 : index
      %202 = vector.load %arg3[%c6_90, %c0_91, %c0_92] : memref<7x4x12xf32, #tpu.memory_space<vmem>>, vector<1x4x12xf32>
      %203 = vector.shape_cast %202 : vector<1x4x12xf32> to vector<4x12xf32>
      %c7 = arith.constant 7 : index
      %c0_93 = arith.constant 0 : index
      %c0_94 = arith.constant 0 : index
      %204 = vector.load %arg5[%c7, %c0_93, %c0_94] : memref<8x4x1xf32, #tpu.memory_space<vmem>>, vector<1x4x1xf32>
      %205 = vector.shape_cast %204 : vector<1x4x1xf32> to vector<4x1xf32>
      %cst_95 = arith.constant 0.000000e+00 : f32
      %206 = vector.broadcast %cst_95 : f32 to vector<4x1xf32>
      %207 = tpu.concatenate %206, %201, %206 in 1 : vector<4x1xf32>, vector<4x16xf32>, vector<4x1xf32> -> vector<4x18xf32>
      %208 = vector.extract_strided_slice %207 {offsets = [0, 0], sizes = [4, 16], strides = [1, 1]} : vector<4x18xf32> to vector<4x16xf32>
      %cst_96 = arith.constant 0.000000e+00 : f32
      %209 = vector.shape_cast %42 : vector<1x16xi1> to vector<1x16xi1>
      %210 = vector.broadcast %209 : vector<1x16xi1> to vector<4x16xi1>
      %211 = vector.broadcast %cst_96 : f32 to vector<4x16xf32>
      %212 = arith.select %210, %211, %208 : vector<4x16xi1>, vector<4x16xf32>
      %213 = vector.extract_strided_slice %207 {offsets = [0, 2], sizes = [4, 16], strides = [1, 1]} : vector<4x18xf32> to vector<4x16xf32>
      %cst_97 = arith.constant 0.000000e+00 : f32
      %214 = vector.shape_cast %44 : vector<1x16xi1> to vector<1x16xi1>
      %215 = vector.broadcast %214 : vector<1x16xi1> to vector<4x16xi1>
      %216 = vector.broadcast %cst_97 : f32 to vector<4x16xf32>
      %217 = arith.select %215, %216, %213 : vector<4x16xi1>, vector<4x16xf32>
      %218 = tpu.concatenate %212, %201, %217 in 0 : vector<4x16xf32>, vector<4x16xf32>, vector<4x16xf32> -> vector<12x16xf32>
      %cst_98 = arith.constant dense<0.000000e+00> : vector<4x16xf32>
      %219 = tpu.matmul %203, %218, %cst_98 {dimension_numbers = #tpu.dot_dimension_numbers<[1], [0], [0], [1], [0, 0, 1, 1], [], []>} : vector<4x12xf32>, vector<12x16xf32>, vector<4x16xf32> -> vector<4x16xf32>
      %220 = vector.broadcast %205 : vector<4x1xf32> to vector<4x16xf32>
      %221 = arith.addf %219, %220 : vector<4x16xf32>
      %cst_99 = arith.constant 0.000000e+00 : f32
      %222 = vector.broadcast %cst_99 : f32 to vector<4x16xf32>
      %223 = arith.maximumf %221, %222 : vector<4x16xf32>
      %c0_100 = arith.constant 0 : index
      %c0_101 = arith.constant 0 : index
      %c0_102 = arith.constant 0 : index
      %224 = vector.load %arg6[%c0_100, %c0_101, %c0_102] : memref<1x4x16xf32, #tpu.memory_space<vmem>>, vector<1x4x16xf32>
      %225 = vector.shape_cast %224 : vector<1x4x16xf32> to vector<4x16xf32>
      %226 = vector.shape_cast %223 : vector<4x16xf32> to vector<1x4x16xf32>
      tpu.vector_store %arg6[%c0_100, %c0_101, %c0_102], %226 {strides = array<i32>} : memref<1x4x16xf32, #tpu.memory_space<vmem>>, vector<1x4x16xf32>,
    } else {
    }
    return
  }
  func.func @transform_0(%arg0: i32, %arg1: i32) -> (i32, i32, i32) {
    %c0_i32 = arith.constant 0 : i32
    %c0_i32_0 = arith.constant 0 : i32
    return %arg0, %c0_i32, %arg1 : i32, i32, i32
  }
  func.func @transform_1(%arg0: i32, %arg1: i32) -> (i32, i32, i32) {
    %c0_i32 = arith.constant 0 : i32
    %c0_i32_0 = arith.constant 0 : i32
    %c0_i32_1 = arith.constant 0 : i32
    %c0_i32_2 = arith.constant 0 : i32
    return %c0_i32, %c0_i32_0, %c0_i32_1 : i32, i32, i32
  }
  func.func @transform_2(%arg0: i32, %arg1: i32) -> (i32, i32) {
    %c0_i32 = arith.constant 0 : i32
    %c0_i32_0 = arith.constant 0 : i32
    %c0_i32_1 = arith.constant 0 : i32
    return %c0_i32, %c0_i32_0 : i32, i32
  }
  func.func @transform_3(%arg0: i32, %arg1: i32) -> (i32, i32, i32) {
    %c0_i32 = arith.constant 0 : i32
    %c0_i32_0 = arith.constant 0 : i32
    %c0_i32_1 = arith.constant 0 : i32
    %c0_i32_2 = arith.constant 0 : i32
    return %c0_i32, %c0_i32_0, %c0_i32_1 : i32, i32, i32
  }
  func.func @transform_4(%arg0: i32, %arg1: i32) -> (i32, i32, i32) {
    %c0_i32 = arith.constant 0 : i32
    %c0_i32_0 = arith.constant 0 : i32
    %c0_i32_1 = arith.constant 0 : i32
    return %arg0, %c0_i32, %c0_i32_0 : i32, i32, i32
  }
}

</mosaic_0001>

<llo_original>
// kernel: wa_forward.1
$region0: #{wa_forward.1}
  #allocation0 [shape = 'u32[]', space=smem, size = 0x4, offset = 0x4, fixed_abs, tag = 'smem constant byte address 0x4 - core index']
  #allocation1 [shape = 'u32[72,128]{1,0:T(1,128)}', space=vmem, size = 0x9000, scoped, tag = 'internal scratch']
  #allocation2 [shape = 'f32[1,4,128]{2,1,0:T(4,128)}', space=vmem, size = 0x800, scoped, tag = 'scratch operand']
  %s0 = inlined_call_operand.vmem [shape: f32[2,4,256], index: 0, kind: input, shape index: {}]
  %s1 = inlined_call_operand.vmem [shape: f32[7,4,12], index: 1, kind: input, shape index: {}]
  %s2 = inlined_call_operand.vmem [shape: f32[4,36], index: 2, kind: input, shape index: {}]
  %s3 = inlined_call_operand.vmem [shape: f32[8,4,1], index: 3, kind: input, shape index: {}]
  %s4 = inlined_call_operand.hbm [shape: f32[2,4,16], index: 4, kind: output, shape index: {}]
  %s5 = sld [smem:[#allocation0]]
  $region57: #{wa_forward.1} parent=0
    _
  %s7 = ssub.s32 1, %s5
  %s8 = scalar_select 0, %s7, %s5
  $region1: #{wa_forward.1} parent=0
    #allocation3 [shape = 'u8[4096]{0}', space=vmem, size = 0x1000, scoped, tag = 'output window, operand 0']
    #allocation4 [shape = 's32[2]{0}', space=sflag, size = 0x8, scoped, tag = 'scoped memory for wa_forward.1']
    %9 = vsyncpa [#allocation4], 0
    %s10 = scalar_lea.sflag [#allocation4], 1
    %11 = vsyncpa %s10, 0
    loop: start=0, step=1, limit=4
    $region2: #{wa_forward.1} parent=1 // loop_pre_header
      _
    $region3: #{wa_forward.1} parent=1 // loop_header
      %s13 = sphi 0, %s17
      %p14 = scmp.ge.s32.totalorder %s13, 4
      %s20 = sphi 0, %s32
      %s21 = sphi 0, %s28
      %s22 = sphi 0, %s20
      %s23 = sphi 0, %s21
      %s24 = sphi 0, %s22
      %s25 = sphi 0, %s23
      %s37 = sphi 0, %s39
      %s40 = sphi 0, %s37
      %s41 = sphi 0, %s40
      %s57 = sphi 0, %s41
      %s61 = sphi 0, %s61
      %s63 = sphi 0, %s61
      %s64 = sphi 0, %s63
      %s78 = sphi 0, %s64
      %s82 = sphi 0, %s82
      %s84 = sphi 0, %s82
      %s85 = sphi 0, %s84
      %s99 = sphi 0, %s85
      %s103 = sphi 0, %s103
      %s105 = sphi 0, %s103
      %s106 = sphi 0, %s105
      %s120 = sphi 0, %s106
      %s126 = sphi 0, %s128
      %s129 = sphi 0, %s126
      %s130 = sphi 0, %s129
      %s146 = sphi 0, %s130
    $region4: #{wa_forward.1} parent=1 // loop_header_branch
      %16 = sbr.rel (%p14) target = $region8
    $region5: #{wa_forward.1} parent=1 // loop_body
      %s18 = ssub.s32 %s13, 1
      %s19 = ssub.s32 %s13, 2
      %s26 = sadd.s32 1, %s21
      %p27 = scmp.ge.s32.totalorder %s26, 1
      %s28 = scalar_select %p27, 0, %s26
      %s29 = sadd.s32 1, %s20
      %s30 = scalar_select %p27, %s29, %s20
      %p31 = scmp.ge.s32.totalorder %s30, 2
      %s32 = scalar_select %p31, 0, %s30
      %s33 = ssub.s32 %s20, %s32
      %s34 = ssub.s32 %s21, %s28
      %s35 = sor.u32 %s33, %s34
      %p36 = scmp.eq.s32.totalorder %s35, 0
      %s38 = sadd.s32 %s37, 1
      %s39 = scalar_select %p36, %s37, %s38
      %p42 = pneg %p36
      %p43 = scmp.eq.s32.totalorder %s13, 1
      %p44 = por %p42, %p43
      %p45 = scmp.ne.s32.totalorder %s37, %s40
      %p46 = scmp.eq.s32.totalorder %s13, 0
      %p47 = por %p45, %p46
      %p48 = scmp.ne.s32.totalorder %s37, %s40
      %p49 = scmp.eq.s32.totalorder %s18, 1
      %p50 = por %p48, %p49
      %p51 = scmp.ne.s32.totalorder %s40, %s41
      %p52 = scmp.eq.s32.totalorder %s18, 0
      %p53 = por %p51, %p52
      %p54 = scmp.ne.s32.totalorder %s40, %s41
      %p55 = scmp.eq.s32.totalorder %s19, 1
      %p56 = por %p54, %p55
      %p58 = scmp.ne.s32.totalorder %s41, %s57
      %p59 = scmp.eq.s32.totalorder %s19, 0
      %p60 = por %p58, %p59
      %s62 = sadd.s32 %s61, 1
      %p65 = scmp.eq.s32.totalorder %s13, 1
      %p66 = scmp.ne.s32.totalorder %s61, %s63
      %p67 = scmp.eq.s32.totalorder %s13, 0
      %p68 = por %p66, %p67
      %p69 = scmp.ne.s32.totalorder %s61, %s63
      %p70 = scmp.eq.s32.totalorder %s18, 1
      %p71 = por %p69, %p70
      %p72 = scmp.ne.s32.totalorder %s63, %s64
      %p73 = scmp.eq.s32.totalorder %s18, 0
      %p74 = por %p72, %p73
      %p75 = scmp.ne.s32.totalorder %s63, %s64
      %p76 = scmp.eq.s32.totalorder %s19, 1
      %p77 = por %p75, %p76
      %p79 = scmp.ne.s32.totalorder %s64, %s78
      %p80 = scmp.eq.s32.totalorder %s19, 0
      %p81 = por %p79, %p80
      %s83 = sadd.s32 %s82, 1
      %p86 = scmp.eq.s32.totalorder %s13, 1
      %p87 = scmp.ne.s32.totalorder %s82, %s84
      %p88 = scmp.eq.s32.totalorder %s13, 0
      %p89 = por %p87, %p88
      %p90 = scmp.ne.s32.totalorder %s82, %s84
      %p91 = scmp.eq.s32.totalorder %s18, 1
      %p92 = por %p90, %p91
      %p93 = scmp.ne.s32.totalorder %s84, %s85
      %p94 = scmp.eq.s32.totalorder %s18, 0
      %p95 = por %p93, %p94
      %p96 = scmp.ne.s32.totalorder %s84, %s85
      %p97 = scmp.eq.s32.totalorder %s19, 1
      %p98 = por %p96, %p97
      %p100 = scmp.ne.s32.totalorder %s85, %s99
      %p101 = scmp.eq.s32.totalorder %s19, 0
      %p102 = por %p100, %p101
      %s104 = sadd.s32 %s103, 1
      %p107 = scmp.eq.s32.totalorder %s13, 1
      %p108 = scmp.ne.s32.totalorder %s103, %s105
      %p109 = scmp.eq.s32.totalorder %s13, 0
      %p110 = por %p108, %p109
      %p111 = scmp.ne.s32.totalorder %s103, %s105
      %p112 = scmp.eq.s32.totalorder %s18, 1
      %p113 = por %p111, %p112
      %p114 = scmp.ne.s32.totalorder %s105, %s106
      %p115 = scmp.eq.s32.totalorder %s18, 0
      %p116 = por %p114, %p115
      %p117 = scmp.ne.s32.totalorder %s105, %s106
      %p118 = scmp.eq.s32.totalorder %s19, 1
      %p119 = por %p117, %p118
      %p121 = scmp.ne.s32.totalorder %s106, %s120
      %p122 = scmp.eq.s32.totalorder %s19, 0
      %p123 = por %p121, %p122
      %s124 = ssub.s32 %s20, %s32
      %p125 = scmp.eq.s32.totalorder %s124, 0
      %s127 = sadd.s32 %s126, 1
      %s128 = scalar_select %p125, %s126, %s127
      %p131 = pneg %p125
      %p132 = scmp.eq.s32.totalorder %s13, 1
      %p133 = por %p131, %p132
      %p134 = scmp.ne.s32.totalorder %s126, %s129
      %p135 = scmp.eq.s32.totalorder %s13, 0
      %p136 = por %p134, %p135
      %p137 = scmp.ne.s32.totalorder %s126, %s129
      %p138 = scmp.eq.s32.totalorder %s18, 1
      %p139 = por %p137, %p138
      %p140 = scmp.ne.s32.totalorder %s129, %s130
      %p141 = scmp.eq.s32.totalorder %s18, 0
      %p142 = por %p140, %p141
      %p143 = scmp.ne.s32.totalorder %s129, %s130
      %p144 = scmp.eq.s32.totalorder %s19, 1
      %p145 = por %p143, %p144
      %p147 = scmp.ne.s32.totalorder %s130, %s146
      %p148 = scmp.eq.s32.totalorder %s19, 0
      %p149 = por %p147, %p148
      %p150 = scmp.le.s32.totalorder 1, %s13
      %p151 = scmp.lt.s32.totalorder %s13, 3
      %p152 = pnand %p150, %p151
      %p153 = pneg %p152
      // Predicated region
      $region9: #{wa_forward.1} parent=5 // pred_check
        _
      $region10: #{wa_forward.1} parent=5 // pred_check_branch
        %155 = sbr.rel (%p152) target = $region12
      $region11: #{wa_forward.1} parent=5 // pred_region
        %s156 = ssub.s32 %s13, 1
        // Predicated region
        $region13: #{wa_forward.1} parent=11 // pred_check
          %p157 = pneg %p74
        $region14: #{wa_forward.1} parent=11 // pred_check_branch
          %159 = sbr.rel (%p157) target = $region16
        $region15: #{wa_forward.1} parent=11 // pred_region
          _
        $region16: #{wa_forward.1} parent=11 // pred_fallthru
          _
        // Predicated region
        $region17: #{wa_forward.1} parent=11 // pred_check
          %p160 = pneg %p95
        $region18: #{wa_forward.1} parent=11 // pred_check_branch
          %162 = sbr.rel (%p160) target = $region20
        $region19: #{wa_forward.1} parent=11 // pred_region
          _
        $region20: #{wa_forward.1} parent=11 // pred_fallthru
          _
        // Predicated region
        $region21: #{wa_forward.1} parent=11 // pred_check
          %p163 = pneg %p116
        $region22: #{wa_forward.1} parent=11 // pred_check_branch
          %165 = sbr.rel (%p163) target = $region24
        $region23: #{wa_forward.1} parent=11 // pred_region
          _
        $region24: #{wa_forward.1} parent=11 // pred_fallthru
          _
      $region12: #{wa_forward.1} parent=5 // pred_fallthru
        _
      %p166 = scmp.lt.s32.totalorder %s13, 2
      // Predicated region
      $region25: #{wa_forward.1} parent=5 // pred_check
        %p167 = pneg %p166
      $region26: #{wa_forward.1} parent=5 // pred_check_branch
        %169 = sbr.rel (%p167) target = $region28
      $region27: #{wa_forward.1} parent=5 // pred_region
        // Predicated region
        $region29: #{wa_forward.1} parent=27 // pred_check
          %p170 = pneg %p47
        $region30: #{wa_forward.1} parent=27 // pred_check_branch
          %172 = sbr.rel (%p170) target = $region32
        $region31: #{wa_forward.1} parent=27 // pred_region
          %s173 = smul.u32 2, %s21
          %p174 = scmp.lt.s32.totalorder %s20, 1
          %s175 = scalar_select %p174, %s20, 1
          %p176 = scmp.lt.s32.totalorder %s173, 1
          %s177 = scalar_select %p176, %s173, 1
          %s178 = smul.addr %s175, 2
          %s179 = sadd.s32 %s177, %s178
          %s180 = smul.addr %s179, 4
          %s181 = scalar_lea.vmem %s0, %s180
          %s182 = smul.u32 2, %s21
        $region32: #{wa_forward.1} parent=27 // pred_fallthru
          _
      $region28: #{wa_forward.1} parent=5 // pred_fallthru
        _
      %p183 = scmp.le.s32.totalorder 1, %s13
      %p184 = scmp.lt.s32.totalorder %s13, 3
      %p185 = pnand %p183, %p184
      %p186 = pneg %p185
      // Predicated region
      $region33: #{wa_forward.1} parent=5 // pred_check
        _
      $region34: #{wa_forward.1} parent=5 // pred_check_branch
        %188 = sbr.rel (%p185) target = $region36
      $region35: #{wa_forward.1} parent=5 // pred_region
        %s189 = ssub.s32 %s13, 1
        %s190 = smul.u32 2, %s23
        %p191 = scmp.lt.s32.totalorder %s22, 1
        %s192 = scalar_select %p191, %s22, 1
        %p193 = scmp.lt.s32.totalorder %s190, 1
        %s194 = scalar_select %p193, %s190, 1
        %s195 = smul.addr %s192, 2
        %s196 = sadd.s32 %s194, %s195
        %s197 = smul.addr %s196, 4
        %s198 = scalar_lea.vmem %s0, %s197
        %p199 = pneg %p53
        %p200 = pneg %p50
        %p201 = pneg %p74
        %p202 = pneg %p71
        %p203 = pneg %p95
        %p204 = pneg %p92
        %p205 = pneg %p116
        %p206 = pneg %p113
        %p207 = pneg %p142
        %p208 = pneg %p139
        %s209 = sand.u32 %s129, 1
        %s210 = scalar_lea.sflag [#allocation4], %s209
        %s211 = sand.u32 %s129, 1
        %s212 = smul.addr %s211, 4
        %s213 = scalar_lea.vmem [#allocation3], %s212
        %s214 = smul.u32 2, %s23
        %p215 = scmp.lt.s32.totalorder %s22, 1
        %s216 = scalar_select %p215, %s22, 1
        %p217 = scmp.lt.s32.totalorder %s214, 1
        %s218 = scalar_select %p217, %s214, 1
        %s219 = smul.addr %s216, 2
        %s220 = sadd.s32 %s218, %s219
        %s221 = smul.addr %s220, 4
        %s222 = scalar_lea.vmem %s0, %s221
        %s223 = smul.u32 2, %s23
        %p224 = scmp.eq.s32.totalorder %s23, 0
        // Predicated region
        $region37: #{wa_forward.1} parent=35 // pred_check
          %p225 = pneg %p224
        $region38: #{wa_forward.1} parent=35 // pred_check_branch
          %227 = sbr.rel (%p225) target = $region40
        $region39: #{wa_forward.1} parent=35 // pred_region
          %228 = vst [vmem:[#allocation2] sm:$0xf] 0.0
        $region40: #{wa_forward.1} parent=35 // pred_fallthru
          _
        %v229 = vld [vmem:[%s222] sm:$0xff]
        %v230 = vld [vmem:[#allocation2] sm:$0xf]
        %v231 = vadd.f32 %v230, %v229
        %233 = vst [vmem:[#allocation1] ss:$2 sm:$0xff] %v229
        %v234 = vld.sshfl [vmem:[#allocation1 + $0x8] sm:$0xff pattern:$0x75316420]
        %v236 = vadd.f32 %v231, %v234
        %237 = vst [vmem:[#allocation2] sm:$0xf] %v236
        // Predicated region
        $region41: #{wa_forward.1} parent=35 // pred_check
          %p238 = pneg %p224
        $region42: #{wa_forward.1} parent=35 // pred_check_branch
          %240 = sbr.rel (%p238) target = $region44
        $region43: #{wa_forward.1} parent=35 // pred_region
          %v241 = vld [vmem:[#allocation2] sm:$0xf]
          %v242 = vmul.f32 %v241, 0.0625
          %243 = vrot.lane.b32.xlu0 %v242, 64
          %v244 = vpop.permute.xlu0 %243
          %v245 = vadd.f32 %v242, %v244
          %246 = vrot.lane.b32.xlu0 %v245, 32
          %v247 = vpop.permute.xlu0 %246
          %v248 = vadd.f32 %v245, %v247
          %249 = vrot.lane.b32.xlu0 %v248, 16
          %v250 = vpop.permute.xlu0 %249
          %v251 = vadd.f32 %v248, %v250
          %v252 = vlaneseq
          %v253 = vand.u32 %v252, 127
          %vm254 = vcmp.lt.s32.totalorder %v253, 0
          %v255 = vsub.s32 0, %v253
          %v256 = vsel %vm254, %v255, %v253
          %v257 = vshrl.u32 %v256, 4
          %v258 = vand.u32 %v256, 15
          %v259 = vsub.s32 0, %v258
          %v260 = vsel %vm254, %v259, %v258
          %vm261 = vcmp.ne.s32.totalorder %v260, 0
          %vm262 = vcmp.lt.s32.totalorder %v260, 0
          %vm263 = vmand %vm262, %vm261
          %v264 = vadd.s32 %v260, 16
          %v265 = vsel %vm263, %v264, %v260
          %vm266 = vcmp.eq.s32.totalorder %v265, 0
          %vm267 = vcmp.eq.s32.totalorder %v265, 15
          %v268 = vld [vmem:[%s1] sm:$0xf]
          %v269 = vld [vmem:[%s3] sm:$0xf]
          %s270 = scalar_lea.vmem %s1, 4
          %v271 = vld [vmem:[%s270] sm:$0xf]
          %s272 = scalar_lea.vmem %s3, 4
          %v273 = vld [vmem:[%s272] sm:$0xf]
          %275 = vrot.lane.b32.xlu0 %v251, 1
          %v276 = vpop.permute.xlu0 %275
          %vm278 = vcmask 7168
          %v279 = vsel %vm278, 0.0, %v276
          %vm280 = vcmask 138240
          %v281 = vsel %vm280, %v279, 0.0
          %v282 = vsel %vm266, 1, 0
          %vm283 = vcmp.eq.s32.totalorder %v282, 1
          %v284 = vsel %vm283, 0.0, %v281
          %v285 = vsel %vm267, 1, 0
          %vm286 = vcmp.eq.s32.totalorder %v285, 1
          %288 = vrot.lane.b32.xlu0 %v281, 126
          %v289 = vpop.permute.xlu0 %288
          %v291 = vsel %vm286, 0.0, %v289
          %v292 = vrot.slane %v251, 4
          %vm294 = vcmask 1043456
          %v295 = vsel %vm294, %v284, %v292
          %297 = vset.pattern.permute.xlu0 0
          %298 = vperm.xlu0 %297, %v269
          %v299 = vpop.permute.xlu0 %298
          %vm301 = vcmask 97280
          %v303 = vsel %vm301, %v268, 0
          %v306 = vsel %vm294, %v291, 0
          %308 = vmatpush.msra.mxu0 0.0
          %309 = vmatpush.msra.mxu0 0.0
          %310 = vmatpush.msra.mxu0 0.0
          %311 = vmatpush.msra.mxu0 0.0
          %312 = vmatpush.msra.mxu0 0.0
          %313 = vmatpush.msra.mxu0 0.0
          %314 = vmatpush.msra.mxu0 0.0
          %315 = vmatpush.msra.mxu0 0.0
          %316 = vmatpush.msra.mxu0 0.0
          %317 = vmatpush.msra.mxu0 0.0
          %318 = vmatpush.msra.mxu0 0.0
          %319 = vmatpush.msra.mxu0 0.0
          %320 = vmatpush.msra.mxu0 0.0
          %321 = vmatpush.msra.mxu0 0.0
          %322 = vmatpush.msra.mxu0 %v306
          %323 = vmatpush.msra.mxu0 %v295
          %324 = vmatmul.f32.gmra.mxu0 %v303
          %v325 = vpop.f32.mrf.mxu0
          %v326 = vadd.f32 %v299, %v325
          %327 = vdwg.mxu0
          %v328 = vmax.f32 %v326, 0.0
          %330 = vrot.lane.b32.xlu0 %v328, 1
          %v331 = vpop.permute.xlu0 %330
          %v333 = vsel %vm278, 0.0, %v331
          %v334 = vsel %vm280, %v333, 0.0
          %v335 = vsel %vm283, 0.0, %v334
          %337 = vrot.lane.b32.xlu0 %v334, 126
          %v338 = vpop.permute.xlu0 %337
          %v340 = vsel %vm286, 0.0, %v338
          %v341 = vrot.slane %v328, 4
          %v343 = vsel %vm294, %v335, %v341
          %345 = vset.pattern.permute.xlu0 0
          %346 = vperm.xlu0 %345, %v273
          %v347 = vpop.permute.xlu0 %346
          %v350 = vsel %vm301, %v271, 0
          %v353 = vsel %vm294, %v340, 0
          %355 = vmatpush.msra.mxu0 0.0
          %356 = vmatpush.msra.mxu0 0.0
          %357 = vmatpush.msra.mxu0 0.0
          %358 = vmatpush.msra.mxu0 0.0
          %359 = vmatpush.msra.mxu0 0.0
          %360 = vmatpush.msra.mxu0 0.0
          %361 = vmatpush.msra.mxu0 0.0
          %362 = vmatpush.msra.mxu0 0.0
          %363 = vmatpush.msra.mxu0 0.0
          %364 = vmatpush.msra.mxu0 0.0
          %365 = vmatpush.msra.mxu0 0.0
          %366 = vmatpush.msra.mxu0 0.0
          %367 = vmatpush.msra.mxu0 0.0
          %368 = vmatpush.msra.mxu0 0.0
          %369 = vmatpush.msra.mxu0 %v353
          %370 = vmatpush.msra.mxu0 %v343
          %371 = vmatmul.f32.gmra.mxu0 %v350
          %v372 = vpop.f32.mrf.mxu0
          %v373 = vadd.f32 %v347, %v372
          %374 = vdwg.mxu0
          %v375 = vmax.f32 %v373, 0.0
          %v376 = vmul.f32 %v375, %v251
          %s377 = scalar_lea.vmem %s1, 8
          %v378 = vld [vmem:[%s377] sm:$0xf]
          %s379 = scalar_lea.vmem %s3, 8
          %v380 = vld [vmem:[%s379] sm:$0xf]
          %s381 = scalar_lea.vmem %s1, 12
          %v382 = vld [vmem:[%s381] sm:$0xf]
          %s383 = scalar_lea.vmem %s3, 12
          %v384 = vld [vmem:[%s383] sm:$0xf]
          %386 = vrot.lane.b32.xlu0 %v376, 1
          %v387 = vpop.permute.xlu0 %386
          %v389 = vsel %vm278, 0.0, %v387
          %v390 = vsel %vm280, %v389, 0.0
          %v391 = vsel %vm283, 0.0, %v390
          %393 = vrot.lane.b32.xlu0 %v390, 126
          %v394 = vpop.permute.xlu0 %393
          %v396 = vsel %vm286, 0.0, %v394
          %v397 = vrot.slane %v376, 4
          %v399 = vsel %vm294, %v391, %v397
          %401 = vset.pattern.permute.xlu0 0
          %402 = vperm.xlu0 %401, %v380
          %v403 = vpop.permute.xlu0 %402
          %v406 = vsel %vm301, %v378, 0
          %v409 = vsel %vm294, %v396, 0
          %411 = vmatpush.msra.mxu0 0.0
          %412 = vmatpush.msra.mxu0 0.0
          %413 = vmatpush.msra.mxu0 0.0
          %414 = vmatpush.msra.mxu0 0.0
          %415 = vmatpush.msra.mxu0 0.0
          %416 = vmatpush.msra.mxu0 0.0
          %417 = vmatpush.msra.mxu0 0.0
          %418 = vmatpush.msra.mxu0 0.0
          %419 = vmatpush.msra.mxu0 0.0
          %420 = vmatpush.msra.mxu0 0.0
          %421 = vmatpush.msra.mxu0 0.0
          %422 = vmatpush.msra.mxu0 0.0
          %423 = vmatpush.msra.mxu0 0.0
          %424 = vmatpush.msra.mxu0 0.0
          %425 = vmatpush.msra.mxu0 %v409
          %426 = vmatpush.msra.mxu0 %v399
          %427 = vmatmul.f32.gmra.mxu0 %v406
          %v428 = vpop.f32.mrf.mxu0
          %v429 = vadd.f32 %v403, %v428
          %430 = vdwg.mxu0
          %v431 = vmax.f32 %v429, 0.0
          %433 = vrot.lane.b32.xlu0 %v431, 1
          %v434 = vpop.permute.xlu0 %433
          %v436 = vsel %vm278, 0.0, %v434
          %v437 = vsel %vm280, %v436, 0.0
          %v438 = vsel %vm283, 0.0, %v437
          %440 = vrot.lane.b32.xlu0 %v437, 126
          %v441 = vpop.permute.xlu0 %440
          %v443 = vsel %vm286, 0.0, %v441
          %v444 = vrot.slane %v431, 4
          %v446 = vsel %vm294, %v438, %v444
          %448 = vset.pattern.permute.xlu0 0
          %449 = vperm.xlu0 %448, %v384
          %v450 = vpop.permute.xlu0 %449
          %v453 = vsel %vm301, %v382, 0
          %v456 = vsel %vm294, %v443, 0
          %458 = vmatpush.msra.mxu0 0.0
          %459 = vmatpush.msra.mxu0 0.0
          %460 = vmatpush.msra.mxu0 0.0
          %461 = vmatpush.msra.mxu0 0.0
          %462 = vmatpush.msra.mxu0 0.0
          %463 = vmatpush.msra.mxu0 0.0
          %464 = vmatpush.msra.mxu0 0.0
          %465 = vmatpush.msra.mxu0 0.0
          %466 = vmatpush.msra.mxu0 0.0
          %467 = vmatpush.msra.mxu0 0.0
          %468 = vmatpush.msra.mxu0 0.0
          %469 = vmatpush.msra.mxu0 0.0
          %470 = vmatpush.msra.mxu0 0.0
          %471 = vmatpush.msra.mxu0 0.0
          %472 = vmatpush.msra.mxu0 %v456
          %473 = vmatpush.msra.mxu0 %v446
          %474 = vmatmul.f32.gmra.mxu0 %v453
          %v475 = vpop.f32.mrf.mxu0
          %v476 = vadd.f32 %v450, %v475
          %477 = vdwg.mxu0
          %v478 = vmax.f32 %v476, 0.0
          %v479 = vmul.f32 %v478, %v376
          %s480 = scalar_lea.vmem %s1, 16
          %v481 = vld [vmem:[%s480] sm:$0xf]
          %s482 = scalar_lea.vmem %s3, 16
          %v483 = vld [vmem:[%s482] sm:$0xf]
          %s484 = scalar_lea.vmem %s1, 20
          %v485 = vld [vmem:[%s484] sm:$0xf]
          %s486 = scalar_lea.vmem %s3, 20
          %v487 = vld [vmem:[%s486] sm:$0xf]
          %489 = vrot.lane.b32.xlu0 %v479, 1
          %v490 = vpop.permute.xlu0 %489
          %v492 = vsel %vm278, 0.0, %v490
          %v493 = vsel %vm280, %v492, 0.0
          %v494 = vsel %vm283, 0.0, %v493
          %496 = vrot.lane.b32.xlu0 %v493, 126
          %v497 = vpop.permute.xlu0 %496
          %v499 = vsel %vm286, 0.0, %v497
          %v500 = vrot.slane %v479, 4
          %v502 = vsel %vm294, %v494, %v500
          %504 = vset.pattern.permute.xlu0 0
          %505 = vperm.xlu0 %504, %v483
          %v506 = vpop.permute.xlu0 %505
          %v509 = vsel %vm301, %v481, 0
          %v512 = vsel %vm294, %v499, 0
          %514 = vmatpush.msra.mxu0 0.0
          %515 = vmatpush.msra.mxu0 0.0
          %516 = vmatpush.msra.mxu0 0.0
          %517 = vmatpush.msra.mxu0 0.0
          %518 = vmatpush.msra.mxu0 0.0
          %519 = vmatpush.msra.mxu0 0.0
          %520 = vmatpush.msra.mxu0 0.0
          %521 = vmatpush.msra.mxu0 0.0
          %522 = vmatpush.msra.mxu0 0.0
          %523 = vmatpush.msra.mxu0 0.0
          %524 = vmatpush.msra.mxu0 0.0
          %525 = vmatpush.msra.mxu0 0.0
          %526 = vmatpush.msra.mxu0 0.0
          %527 = vmatpush.msra.mxu0 0.0
          %528 = vmatpush.msra.mxu0 %v512
          %529 = vmatpush.msra.mxu0 %v502
          %530 = vmatmul.f32.gmra.mxu0 %v509
          %v531 = vpop.f32.mrf.mxu0
          %v532 = vadd.f32 %v506, %v531
          %533 = vdwg.mxu0
          %v534 = vmax.f32 %v532, 0.0
          %536 = vrot.lane.b32.xlu0 %v534, 1
          %v537 = vpop.permute.xlu0 %536
          %v539 = vsel %vm278, 0.0, %v537
          %v540 = vsel %vm280, %v539, 0.0
          %v541 = vsel %vm283, 0.0, %v540
          %543 = vrot.lane.b32.xlu0 %v540, 126
          %v544 = vpop.permute.xlu0 %543
          %v546 = vsel %vm286, 0.0, %v544
          %v547 = vrot.slane %v534, 4
          %v549 = vsel %vm294, %v541, %v547
          %551 = vset.pattern.permute.xlu0 0
          %552 = vperm.xlu0 %551, %v487
          %v553 = vpop.permute.xlu0 %552
          %v556 = vsel %vm301, %v485, 0
          %v559 = vsel %vm294, %v546, 0
          %561 = vmatpush.msra.mxu0 0.0
          %562 = vmatpush.msra.mxu0 0.0
          %563 = vmatpush.msra.mxu0 0.0
          %564 = vmatpush.msra.mxu0 0.0
          %565 = vmatpush.msra.mxu0 0.0
          %566 = vmatpush.msra.mxu0 0.0
          %567 = vmatpush.msra.mxu0 0.0
          %568 = vmatpush.msra.mxu0 0.0
          %569 = vmatpush.msra.mxu0 0.0
          %570 = vmatpush.msra.mxu0 0.0
          %571 = vmatpush.msra.mxu0 0.0
          %572 = vmatpush.msra.mxu0 0.0
          %573 = vmatpush.msra.mxu0 0.0
          %574 = vmatpush.msra.mxu0 0.0
          %575 = vmatpush.msra.mxu0 %v559
          %576 = vmatpush.msra.mxu0 %v549
          %577 = vmatmul.f32.gmra.mxu0 %v556
          %v578 = vpop.f32.mrf.mxu0
          %v579 = vadd.f32 %v553, %v578
          %580 = vdwg.mxu0
          %v581 = vmax.f32 %v579, 0.0
          %v582 = vmul.f32 %v581, %v479
          %v583 = vsel %vm294, %v376, %v500
          %v584 = vld [vmem:[%s2] sm:$0xf]
          %s585 = scalar_lea.vmem %s3, 24
          %v586 = vld [vmem:[%s585] sm:$0xf]
          %589 = vrot.lane.b32.xlu0 %v583, 1
          %v590 = vpop.permute.xlu0 %589
          %591 = vrot.lane.b32.xlu0 %v582, 1
          %v592 = vpop.permute.xlu0 %591
          %v595 = vsel %vm278, 0.0, %v590
          %v596 = vsel %vm278, 0.0, %v592
          %v597 = vsel %vm280, %v595, 0.0
          %v598 = vsel %vm280, %v596, 0.0
          %v599 = vsel %vm283, 0.0, %v597
          %v600 = vsel %vm283, 0.0, %v598
          %603 = vrot.lane.b32.xlu0 %v597, 126
          %v604 = vpop.permute.xlu0 %603
          %605 = vrot.lane.b32.xlu0 %v598, 126
          %v606 = vpop.permute.xlu0 %605
          %v609 = vsel %vm286, 0.0, %v604
          %v610 = vsel %vm286, 0.0, %v606
          %v611 = vrot.slane %v583, 4
          %v612 = vrot.slane %v582, 4
          %v613 = vsel %vm294, %v611, %v612
          %v616 = vsel %vm294, %v600, %v611
          %618 = vset.pattern.permute.xlu0 0
          %619 = vperm.xlu0 %618, %v586
          %v620 = vpop.permute.xlu0 %619
          %vm622 = vcmask 293888
          %v624 = vsel %vm622, %v584, 0
          %v627 = vsel %vm294, %v610, 0
          %629 = vmatpush.msra.mxu0 0.0
          %630 = vmatpush.msra.mxu0 0.0
          %631 = vmatpush.msra.mxu0 0.0
          %632 = vmatpush.msra.mxu0 0.0
          %633 = vmatpush.msra.mxu0 0.0
          %634 = vmatpush.msra.mxu0 0.0
          %635 = vmatpush.msra.mxu0 0.0
          %636 = vmatpush.msra.mxu0 0.0
          %637 = vmatpush.msra.mxu0 0.0
          %638 = vmatpush.msra.mxu0 0.0
          %639 = vmatpush.msra.mxu0 0.0
          %640 = vmatpush.msra.mxu0 %v627
          %641 = vmatpush.msra.mxu0 %v609
          %642 = vmatpush.msra.mxu0 %v613
          %643 = vmatpush.msra.mxu0 %v616
          %644 = vmatpush.msra.mxu0 %v599
          %645 = vmatmul.f32.gmra.mxu0 %v624
          %v646 = vpop.f32.mrf.mxu0
          %v647 = vadd.f32 %v620, %v646
          %648 = vdwg.mxu0
          %v649 = vmax.f32 %v647, 0.0
          %s650 = scalar_lea.vmem %s1, 24
          %v651 = vld [vmem:[%s650] sm:$0xf]
          %s652 = scalar_lea.vmem %s3, 28
          %v653 = vld [vmem:[%s652] sm:$0xf]
          %655 = vrot.lane.b32.xlu0 %v649, 1
          %v656 = vpop.permute.xlu0 %655
          %v658 = vsel %vm278, 0.0, %v656
          %v659 = vsel %vm280, %v658, 0.0
          %v660 = vsel %vm283, 0.0, %v659
          %662 = vrot.lane.b32.xlu0 %v659, 126
          %v663 = vpop.permute.xlu0 %662
          %v665 = vsel %vm286, 0.0, %v663
          %v666 = vrot.slane %v649, 4
          %v668 = vsel %vm294, %v660, %v666
          %670 = vset.pattern.permute.xlu0 0
          %671 = vperm.xlu0 %670, %v653
          %v672 = vpop.permute.xlu0 %671
          %v675 = vsel %vm301, %v651, 0
          %v678 = vsel %vm294, %v665, 0
          %680 = vmatpush.msra.mxu0 0.0
          %681 = vmatpush.msra.mxu0 0.0
          %682 = vmatpush.msra.mxu0 0.0
          %683 = vmatpush.msra.mxu0 0.0
          %684 = vmatpush.msra.mxu0 0.0
          %685 = vmatpush.msra.mxu0 0.0
          %686 = vmatpush.msra.mxu0 0.0
          %687 = vmatpush.msra.mxu0 0.0
          %688 = vmatpush.msra.mxu0 0.0
          %689 = vmatpush.msra.mxu0 0.0
          %690 = vmatpush.msra.mxu0 0.0
          %691 = vmatpush.msra.mxu0 0.0
          %692 = vmatpush.msra.mxu0 0.0
          %693 = vmatpush.msra.mxu0 0.0
          %694 = vmatpush.msra.mxu0 %v678
          %695 = vmatpush.msra.mxu0 %v668
          %696 = vmatmul.f32.gmra.mxu0 %v675
          %v697 = vpop.f32.mrf.mxu0
          %v698 = vadd.f32 %v672, %v697
          %699 = vdwg.mxu0
          %v700 = vmax.f32 %v698, 0.0
          %vm701 = vcmask 125952
          %702 = vst.msk [vmem:[%s213] sm:$0xf] %vm701, %v700
        $region44: #{wa_forward.1} parent=35 // pred_fallthru
          _
        %s703 = sand.u32 %s129, 1
        %s704 = scalar_lea.sflag [#allocation4], %s703
        %s705 = sand.u32 %s129, 1
        %s706 = smul.addr %s705, 4
        %s707 = scalar_lea.vmem [#allocation3], %s706
        // Predicated region
        $region45: #{wa_forward.1} parent=35 // pred_check
          %p708 = pneg %p139
        $region46: #{wa_forward.1} parent=35 // pred_check_branch
          %710 = sbr.rel (%p708) target = $region48
        $region47: #{wa_forward.1} parent=35 // pred_region
          %712 = vsyncadd %s704, 0
          %s713 = smul.addr %s22, 4
          %s714 = scalar_lea.hbm %s4, %s713
          %s716 = sshll.u32 %s707, 4
          %s717 = int_to_ptr.vmem [resolvable:$true] %s716
          %s718 = sshll.u32 %s714, 4
          %s719 = int_to_ptr.hbm [resolvable:$true] %s718
          %721 = dma.vmem_to_hbm [thread:$0]  %s717, 64, %s719, %s704
        $region48: #{wa_forward.1} parent=35 // pred_fallthru
          _
      $region36: #{wa_forward.1} parent=5 // pred_fallthru
        _
      %p722 = scmp.le.s32.totalorder 2, %s13
      // Predicated region
      $region49: #{wa_forward.1} parent=5 // pred_check
        %p723 = pneg %p722
      $region50: #{wa_forward.1} parent=5 // pred_check_branch
        %725 = sbr.rel (%p723) target = $region52
      $region51: #{wa_forward.1} parent=5 // pred_region
        %s726 = ssub.s32 %s13, 2
        // Predicated region
        $region53: #{wa_forward.1} parent=51 // pred_check
          %p727 = pneg %p145
        $region54: #{wa_forward.1} parent=51 // pred_check_branch
          %729 = sbr.rel (%p727) target = $region56
        $region55: #{wa_forward.1} parent=51 // pred_region
          %s730 = sand.u32 %s130, 1
          %s731 = scalar_lea.sflag [#allocation4], %s730
          %s732 = sand.u32 %s130, 1
          %s733 = smul.addr %s732, 4
          %s734 = scalar_lea.vmem [#allocation3], %s733
          %736 = dma.done %s731, 64
        $region56: #{wa_forward.1} parent=51 // pred_fallthru
          _
      $region52: #{wa_forward.1} parent=5 // pred_fallthru
        _
    $region6: #{wa_forward.1} parent=1 // loop_footer
      %s17 = sadd.s32 1, %s13
    $region7: #{wa_forward.1} parent=1 // loop_footer_branch
      %12 = sbr.rel target = $region3
    $region8: #{wa_forward.1} parent=1 // loop_exit
      _
    %737 = vsyncpa [#allocation4], 1
    %s738 = scalar_lea.sflag [#allocation4], 1
    %739 = vsyncpa %s738, 1

</llo_original>
